<compile_context>
chip_gen: v7x
topology: tpu7x:2x2x1
jax: 0.10.0
libtpu: 0.0.40
codegen_flags: <defaults>
</compile_context>

<pallas_src>
import functools
import math

import jax
import jax.numpy as jnp
from jax.experimental import pallas as pl
from jax.experimental.pallas import tpu as pltpu


# ----------------------------------------------------------------------------
# Fixed-point quantization helpers (plain JAX glue, fully on-device).
# ----------------------------------------------------------------------------
def f2Q(x, data_width, qcode=None):
    if qcode is None:
        maxv = jnp.maximum(jnp.max(jnp.abs(x)), jnp.float32(1e-12))
        qcode = jnp.float32(data_width - 1) - jnp.ceil(jnp.log2(maxv))
    qcode = jnp.asarray(qcode, jnp.float32)
    q = jnp.round(x * jnp.exp2(qcode))
    q = jnp.clip(q, -(2 ** (data_width - 1)), 2 ** (data_width - 1) - 1)
    return q.astype(jnp.float32), qcode


def _round_up(v, m):
    return ((v + m - 1) // m) * m


def _vmem_capacity_bytes():
    """Per-core VMEM capacity; conservative fallback = v7x's 64 MiB."""
    try:
        return int(pltpu.get_tpu_info().vmem_capacity_bytes)
    except Exception:
        return 64 * 1024 * 1024


def _mxu_dtype(override=None):
    """Narrow MXU input dtype for this TPU generation.

    int8 only on chips with an integer MXU (v5e / v6e); bf16 everywhere else
    (v7x, v5p, v4, unknown).  Pass `override` to force a path explicitly, e.g.
    under mock-TPU / multi-backend tracing where jax.devices() may not
    describe the compile target.
    """
    if override is not None:
        return override
    try:
        kind = jax.devices()[0].device_kind.lower()
    except Exception:
        return jnp.bfloat16
    if ("v5e" in kind) or ("v5 lite" in kind) or ("v5lite" in kind) or ("v6" in kind):
        return jnp.int8
    return jnp.bfloat16


# ----------------------------------------------------------------------------
# Pallas kernel: fused-im2col conv as per-tap matmuls + shifted accumulation.
#   Grid: (N, num_cin_chunks); the Cin-chunk axis is last / 'arbitrary'.
#   scale_ref: (1,)                 f32, SMEM   (2^-(qi+qw) dequant factor)
#   x_ref:     (1, TCin, L_in)      int8/bf16   (flattened, spatially padded)
#   w_ref:     (T, Cout_pad, TCin)  int8/bf16   (per-tap weight slices)
#   b_ref:     (Cout_pad, 1)        f32
#   o_ref:     (1, Cout_pad, L_out) f32         (resident across the c axis)
#   acc_ref:   (Cout_pad, L_out)    i32/f32 VMEM scratch accumulator
# ----------------------------------------------------------------------------
def _conv_taps_kernel(scale_ref, x_ref, w_ref, b_ref, o_ref, acc_ref,
                      *, tap_offsets, l_out):
    c = pl.program_id(1)

    @pl.when(c == 0)
    def _init():
        acc_ref[...] = jnp.zeros_like(acc_ref)

    x = x_ref[0]                                   # (TCin, L_in), narrow dtype
    acc = acc_ref[...]
    for t, off in enumerate(tap_offsets):          # static unroll over KH*KW taps
        # (Cout_pad, TCin) @ (TCin, L_in) on the MXU, then shift the 32-bit
        # partial product by the tap's flat offset (static lane slice / XLU
        # relayout — cheap next to the matmul and avoids lane-shifting packed
        # narrow-dtype data).
        part = jnp.dot(w_ref[t], x, preferred_element_type=acc.dtype)
        acc = acc + part[:, off:off + l_out]
    acc_ref[...] = acc

    @pl.when(c == pl.num_programs(1) - 1)
    def _finalize():
        o_ref[0] = (acc_ref[...].astype(jnp.float32) + b_ref[...]) * scale_ref[0]


def conv2d_pallas(x_q, w_q, b_q, scale, stride=(1, 1), padding=(1, 1),
                  dilation=(1, 1), mxu_dtype=None):
    """Fixed-point conv2d.  x_q: (N, Cin, H, W), w_q: (Cout, Cin, KH, KW),
    b_q: (Cout,), all holding quantized integer values as f32.  `scale` is the
    2^-(qcode_i + qcode_w) dequant factor.  Returns f32 NCHW output."""
    N, Cin, H, W = x_q.shape
    Cout, _, KH, KW = w_q.shape
    sh, sw = stride
    ph, pw = padding
    dh, dw = dilation

    OH = (H + 2 * ph - dh * (KH - 1) - 1) // sh + 1
    OW = (W + 2 * pw - dw * (KW - 1) - 1) // sw + 1
    Hp, Wp = H + 2 * ph, W + 2 * pw
    Hd = Hp - dh * (KH - 1)           # dense (stride-1) output rows
    T = KH * KW

    cdt = _mxu_dtype(mxu_dtype)
    esize = jnp.dtype(cdt).itemsize
    is_int = jnp.dtype(cdt) == jnp.dtype(jnp.int8)
    acc_dtype = jnp.int32 if is_int else jnp.float32
    pack = 32 if is_int else 16       # sublane pack of the narrow dtype

    # Flattened spatial lengths.  Taps read up to off_max lanes past an output
    # pixel, so pad the flat input so every static tap slice stays in bounds.
    L_out = Hd * Wp
    off_max = dh * (KH - 1) * Wp + dw * (KW - 1)
    L_in = _round_up(L_out + off_max, 128)

    Cout_pad = _round_up(Cout, 8)     # sublane granule only (no 128-lane pad)

    # ---- Cin chunk width + VMEM limit from the chip's VMEM budget ----------
    capacity = _vmem_capacity_bytes()
    budget = capacity // 2                                  # headroom
    fixed = 3 * Cout_pad * L_out * 4                        # out x2 + accumulator
    per_c = 2 * L_in * esize + 2 * T * Cout_pad * esize     # x + weight, x2 bufs
    tc_cap = max(pack, (budget - fixed) // per_c) if budget > fixed else pack
    if Cin <= tc_cap:
        TCin = _round_up(Cin, pack)
    else:
        TCin = max(128, (tc_cap // 128) * 128)  # chunked: weight lane dim needs 128
    Cin_pad = _round_up(Cin, TCin)
    n_chunks = Cin_pad // TCin

    vmem_need = fixed + per_c * TCin
    vmem_limit = int(min(0.9 * capacity, max(2 * vmem_need, 32 * 1024 * 1024)))

    # ---- operand preparation (1x-input-size XLA copies; NO im2col) ---------
    xn = jnp.pad(x_q.astype(cdt),
                 ((0, 0), (0, Cin_pad - Cin), (ph, ph), (pw, pw)))
    xf = jnp.pad(xn.reshape(N, Cin_pad, Hp * Wp),
                 ((0, 0), (0, 0), (0, L_in - Hp * Wp)))           # (N, Cin_pad, L_in)

    wt = w_q.transpose(2, 3, 0, 1).reshape(T, Cout, Cin)          # [t, co, ci]
    wt = jnp.pad(wt, ((0, 0), (0, Cout_pad - Cout),
                      (0, Cin_pad - Cin))).astype(cdt)            # (T, Cout_pad, Cin_pad)

    bt = jnp.pad(b_q.astype(jnp.float32).reshape(Cout, 1),
                 ((0, Cout_pad - Cout), (0, 0)))                  # (Cout_pad, 1)

    scale_arr = jnp.reshape(jnp.asarray(scale, jnp.float32), (1,))

    tap_offsets = tuple(kh * dh * Wp + kw * dw
                        for kh in range(KH) for kw in range(KW))

    kernel = functools.partial(_conv_taps_kernel,
                               tap_offsets=tap_offsets, l_out=L_out)

    out = pl.pallas_call(
        kernel,
        out_shape=jax.ShapeDtypeStruct((N, Cout_pad, L_out), jnp.float32),
        grid=(N, n_chunks),
        in_specs=[
            pl.BlockSpec(memory_space=pltpu.MemorySpace.SMEM),            # scale
            pl.BlockSpec((1, TCin, L_in), lambda n, c: (n, c, 0)),        # input
            pl.BlockSpec((T, Cout_pad, TCin), lambda n, c: (0, 0, c)),    # weights
            pl.BlockSpec((Cout_pad, 1), lambda n, c: (0, 0)),             # bias
        ],
        out_specs=pl.BlockSpec((1, Cout_pad, L_out), lambda n, c: (n, 0, 0)),
        scratch_shapes=[pltpu.VMEM((Cout_pad, L_out), acc_dtype)],
        compiler_params=pltpu.CompilerParams(
            dimension_semantics=("parallel", "arbitrary"),
            vmem_limit_bytes=vmem_limit),
    )(scale_arr, xf, wt, bt)

    # Dense (stride-1) rows/cols -> requested stride; drop Cout / right-edge pad.
    out = out.reshape(N, Cout_pad, Hd, Wp)
    return out[:, :Cout, ::sh, ::sw][:, :, :OH, :OW]


# ----------------------------------------------------------------------------
# Module equivalent: Conv2d(in=4, out=8, kernel=3, stride=1, padding=1, bias)
# forward(input, data_width=8)
# ----------------------------------------------------------------------------
@functools.partial(jax.jit,
                   static_argnames=("data_width", "stride", "padding",
                                    "dilation"))
def conv2d_module_forward(x, weight, bias, data_width=8,
                          stride=(1, 1), padding=(1, 1), dilation=(1, 1)):
    w_q, qcode_w = f2Q(weight, data_width)
    x_q, qcode_i = f2Q(x, data_width)
    b_q, _ = f2Q(bias, 16, qcode_w + qcode_i)
    scale = jnp.exp2(-(qcode_i + qcode_w))                      # Q2f factor
    return conv2d_pallas(x_q, w_q, b_q, scale, stride, padding, dilation)


if __name__ == "__main__":
    key = jax.random.PRNGKey(0)
    k_x, k_w, k_b = jax.random.split(key, 3)

    # Small shapes consistent with the module: N=2, Cin=4, H=W=16, Cout=8, 3x3.
    N, Cin, H, W = 2, 4, 16, 16
    Cout, KH, KW = 8, 3, 3
    stride, padding, dilation = (1, 1), (1, 1), (1, 1)

    # Deterministic parameter init mirroring _ConvNd.reset_parameters:
    # uniform(-stdv, stdv) with stdv = 1/sqrt(in_channels * KH * KW).
    stdv = 1.0 / math.sqrt(Cin * KH * KW)
    weight = jax.random.uniform(k_w, (Cout, Cin, KH, KW), jnp.float32, -stdv, stdv)
    bias = jax.random.uniform(k_b, (Cout,), jnp.float32, -stdv, stdv)
    x = jax.random.normal(k_x, (N, Cin, H, W), jnp.float32)

    y = conv2d_module_forward(x, weight, bias, data_width=8,
                              stride=stride, padding=padding, dilation=dilation)
    y = jax.block_until_ready(y)

    # Reference check against XLA conv on the same quantized operands.
    w_q, qcode_w = f2Q(weight, 8)
    x_q, qcode_i = f2Q(x, 8)
    b_q, _ = f2Q(bias, 16, qcode_w + qcode_i)
    ref = jax.lax.conv_general_dilated(
        x_q, w_q, window_strides=stride,
        padding=[(padding[0], padding[0]), (padding[1], padding[1])],
        rhs_dilation=dilation, dimension_numbers=("NCHW", "OIHW", "NCHW"))
    ref = (ref + b_q[None, :, None, None]) * jnp.exp2(-(qcode_i + qcode_w))

    assert y.shape == (N, Cout, H, W)
    assert jnp.allclose(y, ref, atol=1e-4, rtol=1e-4)
    print("KERNEL_OK")
</pallas_src>

<mosaic_0001>
module attributes {stable_mosaic.version = 11 : i64} {
  func.func @_conv_taps_kernel(%arg0: i32, %arg1: i32, %arg2: memref<1xf32, #tpu.memory_space<smem>>, %arg3: memref<1x16x384xbf16, #tpu.memory_space<vmem>>, %arg4: memref<9x8x16xbf16, #tpu.memory_space<vmem>>, %arg5: memref<8x1xf32, #tpu.memory_space<vmem>>, %arg6: memref<1x8x288xf32, #tpu.memory_space<vmem>>, %arg7: memref<8x288xf32, #tpu.memory_space<vmem>>) attributes {dimension_semantics = [#tpu.dimension_semantics<parallel>, #tpu.dimension_semantics<arbitrary>], iteration_bounds = array<i64: 2, 1>, scalar_prefetch = 0 : i64, scratch_operands = 1 : i64, tpu.core_type = #tpu.core_type<tc>, window_params = [{transform_indices = @transform_0, window_bounds = array<i64: 1>}, {transform_indices = @transform_1, window_bounds = array<i64: 1, 16, 384>}, {transform_indices = @transform_2, window_bounds = array<i64: 9, 8, 16>}, {pipeline_mode = #tpu.pipeline_mode<synchronous>, transform_indices = @transform_3, window_bounds = array<i64: 8, 1>}, {transform_indices = @transform_4, window_bounds = array<i64: 1, 8, 288>}]} {
    %c0_i32 = arith.constant 0 : i32
    %0 = arith.cmpi eq, %arg1, %c0_i32 : i32
    %1 = arith.extui %0 : i1 to i32
    %c0_i32_0 = arith.constant 0 : i32
    %2 = arith.cmpi ne, %1, %c0_i32_0 : i32
    scf.if %2 {
      %cst_36 = arith.constant 0.000000e+00 : f32
      %55 = vector.broadcast %cst_36 : f32 to vector<8x288xf32>
      %c0_37 = arith.constant 0 : index
      %c0_38 = arith.constant 0 : index
      %56 = vector.load %arg7[%c0_37, %c0_38] : memref<8x288xf32, #tpu.memory_space<vmem>>, vector<8x288xf32>
      tpu.vector_store %arg7[%c0_37, %c0_38], %55 {strides = array<i32>} : memref<8x288xf32, #tpu.memory_space<vmem>>, vector<8x288xf32>,
    } else {
    }
    %c0 = arith.constant 0 : index
    %c0_1 = arith.constant 0 : index
    %c0_2 = arith.constant 0 : index
    %3 = vector.load %arg3[%c0, %c0_1, %c0_2] : memref<1x16x384xbf16, #tpu.memory_space<vmem>>, vector<1x16x384xbf16>
    %4 = vector.shape_cast %3 : vector<1x16x384xbf16> to vector<16x384xbf16>
    %c0_3 = arith.constant 0 : index
    %c0_4 = arith.constant 0 : index
    %5 = vector.load %arg7[%c0_3, %c0_4] : memref<8x288xf32, #tpu.memory_space<vmem>>, vector<8x288xf32>
    %c0_5 = arith.constant 0 : index
    %c0_6 = arith.constant 0 : index
    %c0_7 = arith.constant 0 : index
    %6 = vector.load %arg4[%c0_5, %c0_6, %c0_7] : memref<9x8x16xbf16, #tpu.memory_space<vmem>>, vector<1x8x16xbf16>
    %7 = vector.shape_cast %6 : vector<1x8x16xbf16> to vector<8x16xbf16>
    %cst = arith.constant dense<0.000000e+00> : vector<8x384xf32>
    %8 = tpu.matmul %7, %4, %cst {dimension_numbers = #tpu.dot_dimension_numbers<[1], [0], [0], [1], [0, 0, 1, 1], [], []>} : vector<8x16xbf16>, vector<16x384xbf16>, vector<8x384xf32> -> vector<8x384xf32>
    %9 = vector.extract_strided_slice %8 {offsets = [0, 0], sizes = [8, 288], strides = [1, 1]} : vector<8x384xf32> to vector<8x288xf32>
    %10 = arith.addf %5, %9 : vector<8x288xf32>
    %c1 = arith.constant 1 : index
    %c0_8 = arith.constant 0 : index
    %c0_9 = arith.constant 0 : index
    %11 = vector.load %arg4[%c1, %c0_8, %c0_9] : memref<9x8x16xbf16, #tpu.memory_space<vmem>>, vector<1x8x16xbf16>
    %12 = vector.shape_cast %11 : vector<1x8x16xbf16> to vector<8x16xbf16>
    %cst_10 = arith.constant dense<0.000000e+00> : vector<8x384xf32>
    %13 = tpu.matmul %12, %4, %cst_10 {dimension_numbers = #tpu.dot_dimension_numbers<[1], [0], [0], [1], [0, 0, 1, 1], [], []>} : vector<8x16xbf16>, vector<16x384xbf16>, vector<8x384xf32> -> vector<8x384xf32>
    %14 = vector.extract_strided_slice %13 {offsets = [0, 1], sizes = [8, 288], strides = [1, 1]} : vector<8x384xf32> to vector<8x288xf32>
    %15 = arith.addf %10, %14 : vector<8x288xf32>
    %c2 = arith.constant 2 : index
    %c0_11 = arith.constant 0 : index
    %c0_12 = arith.constant 0 : index
    %16 = vector.load %arg4[%c2, %c0_11, %c0_12] : memref<9x8x16xbf16, #tpu.memory_space<vmem>>, vector<1x8x16xbf16>
    %17 = vector.shape_cast %16 : vector<1x8x16xbf16> to vector<8x16xbf16>
    %cst_13 = arith.constant dense<0.000000e+00> : vector<8x384xf32>
    %18 = tpu.matmul %17, %4, %cst_13 {dimension_numbers = #tpu.dot_dimension_numbers<[1], [0], [0], [1], [0, 0, 1, 1], [], []>} : vector<8x16xbf16>, vector<16x384xbf16>, vector<8x384xf32> -> vector<8x384xf32>
    %19 = vector.extract_strided_slice %18 {offsets = [0, 2], sizes = [8, 288], strides = [1, 1]} : vector<8x384xf32> to vector<8x288xf32>
    %20 = arith.addf %15, %19 : vector<8x288xf32>
    %c3 = arith.constant 3 : index
    %c0_14 = arith.constant 0 : index
    %c0_15 = arith.constant 0 : index
    %21 = vector.load %arg4[%c3, %c0_14, %c0_15] : memref<9x8x16xbf16, #tpu.memory_space<vmem>>, vector<1x8x16xbf16>
    %22 = vector.shape_cast %21 : vector<1x8x16xbf16> to vector<8x16xbf16>
    %cst_16 = arith.constant dense<0.000000e+00> : vector<8x384xf32>
    %23 = tpu.matmul %22, %4, %cst_16 {dimension_numbers = #tpu.dot_dimension_numbers<[1], [0], [0], [1], [0, 0, 1, 1], [], []>} : vector<8x16xbf16>, vector<16x384xbf16>, vector<8x384xf32> -> vector<8x384xf32>
    %24 = vector.extract_strided_slice %23 {offsets = [0, 18], sizes = [8, 288], strides = [1, 1]} : vector<8x384xf32> to vector<8x288xf32>
    %25 = arith.addf %20, %24 : vector<8x288xf32>
    %c4 = arith.constant 4 : index
    %c0_17 = arith.constant 0 : index
    %c0_18 = arith.constant 0 : index
    %26 = vector.load %arg4[%c4, %c0_17, %c0_18] : memref<9x8x16xbf16, #tpu.memory_space<vmem>>, vector<1x8x16xbf16>
    %27 = vector.shape_cast %26 : vector<1x8x16xbf16> to vector<8x16xbf16>
    %cst_19 = arith.constant dense<0.000000e+00> : vector<8x384xf32>
    %28 = tpu.matmul %27, %4, %cst_19 {dimension_numbers = #tpu.dot_dimension_numbers<[1], [0], [0], [1], [0, 0, 1, 1], [], []>} : vector<8x16xbf16>, vector<16x384xbf16>, vector<8x384xf32> -> vector<8x384xf32>
    %29 = vector.extract_strided_slice %28 {offsets = [0, 19], sizes = [8, 288], strides = [1, 1]} : vector<8x384xf32> to vector<8x288xf32>
    %30 = arith.addf %25, %29 : vector<8x288xf32>
    %c5 = arith.constant 5 : index
    %c0_20 = arith.constant 0 : index
    %c0_21 = arith.constant 0 : index
    %31 = vector.load %arg4[%c5, %c0_20, %c0_21] : memref<9x8x16xbf16, #tpu.memory_space<vmem>>, vector<1x8x16xbf16>
    %32 = vector.shape_cast %31 : vector<1x8x16xbf16> to vector<8x16xbf16>
    %cst_22 = arith.constant dense<0.000000e+00> : vector<8x384xf32>
    %33 = tpu.matmul %32, %4, %cst_22 {dimension_numbers = #tpu.dot_dimension_numbers<[1], [0], [0], [1], [0, 0, 1, 1], [], []>} : vector<8x16xbf16>, vector<16x384xbf16>, vector<8x384xf32> -> vector<8x384xf32>
    %34 = vector.extract_strided_slice %33 {offsets = [0, 20], sizes = [8, 288], strides = [1, 1]} : vector<8x384xf32> to vector<8x288xf32>
    %35 = arith.addf %30, %34 : vector<8x288xf32>
    %c6 = arith.constant 6 : index
    %c0_23 = arith.constant 0 : index
    %c0_24 = arith.constant 0 : index
    %36 = vector.load %arg4[%c6, %c0_23, %c0_24] : memref<9x8x16xbf16, #tpu.memory_space<vmem>>, vector<1x8x16xbf16>
    %37 = vector.shape_cast %36 : vector<1x8x16xbf16> to vector<8x16xbf16>
    %cst_25 = arith.constant dense<0.000000e+00> : vector<8x384xf32>
    %38 = tpu.matmul %37, %4, %cst_25 {dimension_numbers = #tpu.dot_dimension_numbers<[1], [0], [0], [1], [0, 0, 1, 1], [], []>} : vector<8x16xbf16>, vector<16x384xbf16>, vector<8x384xf32> -> vector<8x384xf32>
    %39 = vector.extract_strided_slice %38 {offsets = [0, 36], sizes = [8, 288], strides = [1, 1]} : vector<8x384xf32> to vector<8x288xf32>
    %40 = arith.addf %35, %39 : vector<8x288xf32>
    %c7 = arith.constant 7 : index
    %c0_26 = arith.constant 0 : index
    %c0_27 = arith.constant 0 : index
    %41 = vector.load %arg4[%c7, %c0_26, %c0_27] : memref<9x8x16xbf16, #tpu.memory_space<vmem>>, vector<1x8x16xbf16>
    %42 = vector.shape_cast %41 : vector<1x8x16xbf16> to vector<8x16xbf16>
    %cst_28 = arith.constant dense<0.000000e+00> : vector<8x384xf32>
    %43 = tpu.matmul %42, %4, %cst_28 {dimension_numbers = #tpu.dot_dimension_numbers<[1], [0], [0], [1], [0, 0, 1, 1], [], []>} : vector<8x16xbf16>, vector<16x384xbf16>, vector<8x384xf32> -> vector<8x384xf32>
    %44 = vector.extract_strided_slice %43 {offsets = [0, 37], sizes = [8, 288], strides = [1, 1]} : vector<8x384xf32> to vector<8x288xf32>
    %45 = arith.addf %40, %44 : vector<8x288xf32>
    %c8 = arith.constant 8 : index
    %c0_29 = arith.constant 0 : index
    %c0_30 = arith.constant 0 : index
    %46 = vector.load %arg4[%c8, %c0_29, %c0_30] : memref<9x8x16xbf16, #tpu.memory_space<vmem>>, vector<1x8x16xbf16>
    %47 = vector.shape_cast %46 : vector<1x8x16xbf16> to vector<8x16xbf16>
    %cst_31 = arith.constant dense<0.000000e+00> : vector<8x384xf32>
    %48 = tpu.matmul %47, %4, %cst_31 {dimension_numbers = #tpu.dot_dimension_numbers<[1], [0], [0], [1], [0, 0, 1, 1], [], []>} : vector<8x16xbf16>, vector<16x384xbf16>, vector<8x384xf32> -> vector<8x384xf32>
    %49 = vector.extract_strided_slice %48 {offsets = [0, 38], sizes = [8, 288], strides = [1, 1]} : vector<8x384xf32> to vector<8x288xf32>
    %50 = arith.addf %45, %49 : vector<8x288xf32>
    %c0_32 = arith.constant 0 : index
    %c0_33 = arith.constant 0 : index
    %51 = vector.load %arg7[%c0_32, %c0_33] : memref<8x288xf32, #tpu.memory_space<vmem>>, vector<8x288xf32>
    tpu.vector_store %arg7[%c0_32, %c0_33], %50 {strides = array<i32>} : memref<8x288xf32, #tpu.memory_space<vmem>>, vector<8x288xf32>,
    %c0_i32_34 = arith.constant 0 : i32
    %52 = arith.cmpi eq, %arg1, %c0_i32_34 : i32
    %53 = arith.extui %52 : i1 to i32
    %c0_i32_35 = arith.constant 0 : i32
    %54 = arith.cmpi ne, %53, %c0_i32_35 : i32
    scf.if %54 {
      %c0_36 = arith.constant 0 : index
      %c0_37 = arith.constant 0 : index
      %55 = vector.load %arg7[%c0_36, %c0_37] : memref<8x288xf32, #tpu.memory_space<vmem>>, vector<8x288xf32>
      %c0_38 = arith.constant 0 : index
      %c0_39 = arith.constant 0 : index
      %56 = vector.load %arg5[%c0_38, %c0_39] : memref<8x1xf32, #tpu.memory_space<vmem>>, vector<8x1xf32>
      %57 = vector.broadcast %56 : vector<8x1xf32> to vector<8x288xf32>
      %58 = arith.addf %55, %57 : vector<8x288xf32>
      %c0_40 = arith.constant 0 : index
      %59 = memref.load %arg2[%c0_40] : memref<1xf32, #tpu.memory_space<smem>>
      %60 = vector.broadcast %59 : f32 to vector<8x288xf32>
      %61 = arith.mulf %58, %60 : vector<8x288xf32>
      %c0_41 = arith.constant 0 : index
      %c0_42 = arith.constant 0 : index
      %c0_43 = arith.constant 0 : index
      %62 = vector.load %arg6[%c0_41, %c0_42, %c0_43] : memref<1x8x288xf32, #tpu.memory_space<vmem>>, vector<1x8x288xf32>
      %63 = vector.shape_cast %62 : vector<1x8x288xf32> to vector<8x288xf32>
      %64 = vector.shape_cast %61 : vector<8x288xf32> to vector<1x8x288xf32>
      tpu.vector_store %arg6[%c0_41, %c0_42, %c0_43], %64 {strides = array<i32>} : memref<1x8x288xf32, #tpu.memory_space<vmem>>, vector<1x8x288xf32>,
    } else {
    }
    return
  }
  func.func @transform_0(%arg0: i32, %arg1: i32) -> i32 {
    %c0_i32 = arith.constant 0 : i32
    %c0_i32_0 = arith.constant 0 : i32
    return %c0_i32 : i32
  }
  func.func @transform_1(%arg0: i32, %arg1: i32) -> (i32, i32, i32) {
    %c0_i32 = arith.constant 0 : i32
    %c0_i32_0 = arith.constant 0 : i32
    return %arg0, %arg1, %c0_i32 : i32, i32, i32
  }
  func.func @transform_2(%arg0: i32, %arg1: i32) -> (i32, i32, i32) {
    %c0_i32 = arith.constant 0 : i32
    %c0_i32_0 = arith.constant 0 : i32
    %c0_i32_1 = arith.constant 0 : i32
    return %c0_i32, %c0_i32_0, %arg1 : i32, i32, i32
  }
  func.func @transform_3(%arg0: i32, %arg1: i32) -> (i32, i32) {
    %c0_i32 = arith.constant 0 : i32
    %c0_i32_0 = arith.constant 0 : i32
    %c0_i32_1 = arith.constant 0 : i32
    return %c0_i32, %c0_i32_0 : i32, i32
  }
  func.func @transform_4(%arg0: i32, %arg1: i32) -> (i32, i32, i32) {
    %c0_i32 = arith.constant 0 : i32
    %c0_i32_0 = arith.constant 0 : i32
    %c0_i32_1 = arith.constant 0 : i32
    return %arg0, %c0_i32, %c0_i32_0 : i32, i32, i32
  }
}

</mosaic_0001>

<llo_original>
// kernel: conv2d_module_forward.1
$region0: #{conv2d_module_forward.1}
  #allocation0 [shape = 'u32[]', space=smem, size = 0x4, offset = 0x4, fixed_abs, tag = 'smem constant byte address 0x4 - core index']
  #allocation1 [shape = 'u32[144,128]{1,0:T(1,128)}', space=vmem, size = 0x12000, scoped, tag = 'internal scratch']
  #allocation2 [shape = 'f32[8,288]{1,0:T(8,128)}', space=vmem, size = 0x3000, scoped, tag = 'scratch operand']
  #allocation3 [shape = 'f32[1]{0:T(128)S(6)}', space=smem, size = 0x200, scoped, tag = 'scoped memory for conv2d_module_forward.1']
  %s0 = inlined_call_operand.<no memory space> [shape: f32[1], index: 0, kind: input, shape index: {}]
  %s1 = inlined_call_operand.vmem [shape: bf16[2,16,384], index: 1, kind: input, shape index: {}]
  %s2 = inlined_call_operand.vmem [shape: bf16[9,8,16], index: 2, kind: input, shape index: {}]
  %s3 = inlined_call_operand.vmem [shape: f32[8,1], index: 3, kind: input, shape index: {}]
  %s4 = inlined_call_operand.vmem [shape: f32[2,8,288], index: 4, kind: output, shape index: {}]
  %s5 = sld [smem:[#allocation0]]
  $region57: #{conv2d_module_forward.1} parent=0
    _
  %s7 = ssub.s32 1, %s5
  %s8 = scalar_select 0, %s7, %s5
  %9 = sst [smem:[#allocation3]] %s0
  loop: start=0, step=1, limit=4
  $region2: #{conv2d_module_forward.1} parent=0 // loop_pre_header
    _
  $region3: #{conv2d_module_forward.1} parent=0 // loop_header
    %s11 = sphi 0, %s15
    %p12 = scmp.ge.s32.totalorder %s11, 4
    %s18 = sphi 0, %s30
    %s19 = sphi 0, %s26
    %s20 = sphi 0, %s18
    %s21 = sphi 0, %s19
    %s22 = sphi 0, %s20
    %s23 = sphi 0, %s21
    %s31 = sphi 0, %s31
    %s33 = sphi 0, %s31
    %s34 = sphi 0, %s33
    %s48 = sphi 0, %s34
    %s56 = sphi 0, %s58
    %s59 = sphi 0, %s56
    %s60 = sphi 0, %s59
    %s76 = sphi 0, %s60
    %s82 = sphi 0, %s84
    %s85 = sphi 0, %s82
    %s86 = sphi 0, %s85
    %s102 = sphi 0, %s86
    %s106 = sphi 0, %s106
    %s108 = sphi 0, %s106
    %s109 = sphi 0, %s108
    %s123 = sphi 0, %s109
    %s129 = sphi 0, %s131
    %s132 = sphi 0, %s129
    %s133 = sphi 0, %s132
    %s149 = sphi 0, %s133
  $region4: #{conv2d_module_forward.1} parent=0 // loop_header_branch
    %14 = sbr.rel (%p12) target = $region8
  $region5: #{conv2d_module_forward.1} parent=0 // loop_body
    %s16 = ssub.s32 %s11, 1
    %s17 = ssub.s32 %s11, 2
    %s24 = sadd.s32 1, %s19
    %p25 = scmp.ge.s32.totalorder %s24, 1
    %s26 = scalar_select %p25, 0, %s24
    %s27 = sadd.s32 1, %s18
    %s28 = scalar_select %p25, %s27, %s18
    %p29 = scmp.ge.s32.totalorder %s28, 2
    %s30 = scalar_select %p29, 0, %s28
    %s32 = sadd.s32 %s31, 1
    %p35 = scmp.eq.s32.totalorder %s11, 1
    %p36 = scmp.ne.s32.totalorder %s31, %s33
    %p37 = scmp.eq.s32.totalorder %s11, 0
    %p38 = por %p36, %p37
    %p39 = scmp.ne.s32.totalorder %s31, %s33
    %p40 = scmp.eq.s32.totalorder %s16, 1
    %p41 = por %p39, %p40
    %p42 = scmp.ne.s32.totalorder %s33, %s34
    %p43 = scmp.eq.s32.totalorder %s16, 0
    %p44 = por %p42, %p43
    %p45 = scmp.ne.s32.totalorder %s33, %s34
    %p46 = scmp.eq.s32.totalorder %s17, 1
    %p47 = por %p45, %p46
    %p49 = scmp.ne.s32.totalorder %s34, %s48
    %p50 = scmp.eq.s32.totalorder %s17, 0
    %p51 = por %p49, %p50
    %s52 = ssub.s32 %s18, %s30
    %s53 = ssub.s32 %s19, %s26
    %s54 = sor.u32 %s52, %s53
    %p55 = scmp.eq.s32.totalorder %s54, 0
    %s57 = sadd.s32 %s56, 1
    %s58 = scalar_select %p55, %s56, %s57
    %p61 = pneg %p55
    %p62 = scmp.eq.s32.totalorder %s11, 1
    %p63 = por %p61, %p62
    %p64 = scmp.ne.s32.totalorder %s56, %s59
    %p65 = scmp.eq.s32.totalorder %s11, 0
    %p66 = por %p64, %p65
    %p67 = scmp.ne.s32.totalorder %s56, %s59
    %p68 = scmp.eq.s32.totalorder %s16, 1
    %p69 = por %p67, %p68
    %p70 = scmp.ne.s32.totalorder %s59, %s60
    %p71 = scmp.eq.s32.totalorder %s16, 0
    %p72 = por %p70, %p71
    %p73 = scmp.ne.s32.totalorder %s59, %s60
    %p74 = scmp.eq.s32.totalorder %s17, 1
    %p75 = por %p73, %p74
    %p77 = scmp.ne.s32.totalorder %s60, %s76
    %p78 = scmp.eq.s32.totalorder %s17, 0
    %p79 = por %p77, %p78
    %s80 = ssub.s32 %s19, %s26
    %p81 = scmp.eq.s32.totalorder %s80, 0
    %s83 = sadd.s32 %s82, 1
    %s84 = scalar_select %p81, %s82, %s83
    %p87 = pneg %p81
    %p88 = scmp.eq.s32.totalorder %s11, 1
    %p89 = por %p87, %p88
    %p90 = scmp.ne.s32.totalorder %s82, %s85
    %p91 = scmp.eq.s32.totalorder %s11, 0
    %p92 = por %p90, %p91
    %p93 = scmp.ne.s32.totalorder %s82, %s85
    %p94 = scmp.eq.s32.totalorder %s16, 1
    %p95 = por %p93, %p94
    %p96 = scmp.ne.s32.totalorder %s85, %s86
    %p97 = scmp.eq.s32.totalorder %s16, 0
    %p98 = por %p96, %p97
    %p99 = scmp.ne.s32.totalorder %s85, %s86
    %p100 = scmp.eq.s32.totalorder %s17, 1
    %p101 = por %p99, %p100
    %p103 = scmp.ne.s32.totalorder %s86, %s102
    %p104 = scmp.eq.s32.totalorder %s17, 0
    %p105 = por %p103, %p104
    %s107 = sadd.s32 %s106, 1
    %p110 = scmp.eq.s32.totalorder %s11, 1
    %p111 = scmp.ne.s32.totalorder %s106, %s108
    %p112 = scmp.eq.s32.totalorder %s11, 0
    %p113 = por %p111, %p112
    %p114 = scmp.ne.s32.totalorder %s106, %s108
    %p115 = scmp.eq.s32.totalorder %s16, 1
    %p116 = por %p114, %p115
    %p117 = scmp.ne.s32.totalorder %s108, %s109
    %p118 = scmp.eq.s32.totalorder %s16, 0
    %p119 = por %p117, %p118
    %p120 = scmp.ne.s32.totalorder %s108, %s109
    %p121 = scmp.eq.s32.totalorder %s17, 1
    %p122 = por %p120, %p121
    %p124 = scmp.ne.s32.totalorder %s109, %s123
    %p125 = scmp.eq.s32.totalorder %s17, 0
    %p126 = por %p124, %p125
    %s127 = ssub.s32 %s18, %s30
    %p128 = scmp.eq.s32.totalorder %s127, 0
    %s130 = sadd.s32 %s129, 1
    %s131 = scalar_select %p128, %s129, %s130
    %p134 = pneg %p128
    %p135 = scmp.eq.s32.totalorder %s11, 1
    %p136 = por %p134, %p135
    %p137 = scmp.ne.s32.totalorder %s129, %s132
    %p138 = scmp.eq.s32.totalorder %s11, 0
    %p139 = por %p137, %p138
    %p140 = scmp.ne.s32.totalorder %s129, %s132
    %p141 = scmp.eq.s32.totalorder %s16, 1
    %p142 = por %p140, %p141
    %p143 = scmp.ne.s32.totalorder %s132, %s133
    %p144 = scmp.eq.s32.totalorder %s16, 0
    %p145 = por %p143, %p144
    %p146 = scmp.ne.s32.totalorder %s132, %s133
    %p147 = scmp.eq.s32.totalorder %s17, 1
    %p148 = por %p146, %p147
    %p150 = scmp.ne.s32.totalorder %s133, %s149
    %p151 = scmp.eq.s32.totalorder %s17, 0
    %p152 = por %p150, %p151
    %p153 = scmp.le.s32.totalorder 1, %s11
    %p154 = scmp.lt.s32.totalorder %s11, 3
    %p155 = pnand %p153, %p154
    %p156 = pneg %p155
    // Predicated region
    $region9: #{conv2d_module_forward.1} parent=5 // pred_check
      _
    $region10: #{conv2d_module_forward.1} parent=5 // pred_check_branch
      %158 = sbr.rel (%p155) target = $region12
    $region11: #{conv2d_module_forward.1} parent=5 // pred_region
      %s159 = ssub.s32 %s11, 1
      // Predicated region
      $region13: #{conv2d_module_forward.1} parent=11 // pred_check
        %p160 = pneg %p44
      $region14: #{conv2d_module_forward.1} parent=11 // pred_check_branch
        %162 = sbr.rel (%p160) target = $region16
      $region15: #{conv2d_module_forward.1} parent=11 // pred_region
        _
      $region16: #{conv2d_module_forward.1} parent=11 // pred_fallthru
        _
      // Predicated region
      $region17: #{conv2d_module_forward.1} parent=11 // pred_check
        %p163 = pneg %p98
      $region18: #{conv2d_module_forward.1} parent=11 // pred_check_branch
        %165 = sbr.rel (%p163) target = $region20
      $region19: #{conv2d_module_forward.1} parent=11 // pred_region
        %p166 = scmp.lt.s32.totalorder %s21, 0
        %s167 = scalar_select %p166, %s21, 0
        %s168 = smul.addr %s167, 4
        %s169 = scalar_lea.vmem %s2, %s168
      $region20: #{conv2d_module_forward.1} parent=11 // pred_fallthru
        _
      // Predicated region
      $region21: #{conv2d_module_forward.1} parent=11 // pred_check
        %p170 = pneg %p119
      $region22: #{conv2d_module_forward.1} parent=11 // pred_check_branch
        %172 = sbr.rel (%p170) target = $region24
      $region23: #{conv2d_module_forward.1} parent=11 // pred_region
        _
      $region24: #{conv2d_module_forward.1} parent=11 // pred_fallthru
        _
    $region12: #{conv2d_module_forward.1} parent=5 // pred_fallthru
      _
    %p173 = scmp.lt.s32.totalorder %s11, 2
    // Predicated region
    $region25: #{conv2d_module_forward.1} parent=5 // pred_check
      %p174 = pneg %p173
    $region26: #{conv2d_module_forward.1} parent=5 // pred_check_branch
      %176 = sbr.rel (%p174) target = $region28
    $region27: #{conv2d_module_forward.1} parent=5 // pred_region
      // Predicated region
      $region29: #{conv2d_module_forward.1} parent=27 // pred_check
        %p177 = pneg %p66
      $region30: #{conv2d_module_forward.1} parent=27 // pred_check_branch
        %179 = sbr.rel (%p177) target = $region32
      $region31: #{conv2d_module_forward.1} parent=27 // pred_region
        %s180 = smul.u32 2, %s19
        %p181 = scmp.lt.s32.totalorder %s18, 1
        %s182 = scalar_select %p181, %s18, 1
        %p183 = scmp.lt.s32.totalorder %s180, 1
        %s184 = scalar_select %p183, %s180, 1
        %s185 = smul.addr %s184, 3
        %s186 = smul.addr %s182, 6
        %s187 = sadd.s32 %s185, %s186
        %s188 = smul.addr %s187, 4
        %s189 = scalar_lea.vmem %s1, %s188
        %s190 = smul.u32 2, %s19
      $region32: #{conv2d_module_forward.1} parent=27 // pred_fallthru
        _
    $region28: #{conv2d_module_forward.1} parent=5 // pred_fallthru
      _
    %p191 = scmp.le.s32.totalorder 1, %s11
    %p192 = scmp.lt.s32.totalorder %s11, 3
    %p193 = pnand %p191, %p192
    %p194 = pneg %p193
    // Predicated region
    $region33: #{conv2d_module_forward.1} parent=5 // pred_check
      _
    $region34: #{conv2d_module_forward.1} parent=5 // pred_check_branch
      %196 = sbr.rel (%p193) target = $region36
    $region35: #{conv2d_module_forward.1} parent=5 // pred_region
      %s197 = ssub.s32 %s11, 1
      %p198 = pneg %p44
      %p199 = pneg %p41
      %s200 = smul.u32 2, %s21
      %p201 = scmp.lt.s32.totalorder %s20, 1
      %s202 = scalar_select %p201, %s20, 1
      %p203 = scmp.lt.s32.totalorder %s200, 1
      %s204 = scalar_select %p203, %s200, 1
      %s205 = smul.addr %s204, 3
      %s206 = smul.addr %s202, 6
      %s207 = sadd.s32 %s205, %s206
      %s208 = smul.addr %s207, 4
      %s209 = scalar_lea.vmem %s1, %s208
      %p210 = pneg %p72
      %p211 = pneg %p69
      %p212 = scmp.lt.s32.totalorder %s21, 0
      %s213 = scalar_select %p212, %s21, 0
      %s214 = smul.addr %s213, 4
      %s215 = scalar_lea.vmem %s2, %s214
      %p216 = pneg %p98
      %p217 = pneg %p95
      %p218 = pneg %p119
      %p219 = pneg %p116
      %p220 = pneg %p145
      %p221 = pneg %p142
      %p222 = scmp.lt.s32.totalorder %s20, 1
      %s223 = scalar_select %p222, %s20, 1
      %s224 = smul.addr %s223, 3
      %s225 = smul.addr %s224, 8
      %s226 = scalar_lea.vmem %s4, %s225
      %s227 = smul.u32 2, %s21
      %p228 = scmp.lt.s32.totalorder %s20, 1
      %s229 = scalar_select %p228, %s20, 1
      %p230 = scmp.lt.s32.totalorder %s227, 1
      %s231 = scalar_select %p230, %s227, 1
      %s232 = smul.addr %s231, 3
      %s233 = smul.addr %s229, 6
      %s234 = sadd.s32 %s232, %s233
      %s235 = smul.addr %s234, 4
      %s236 = scalar_lea.vmem %s1, %s235
      %s237 = smul.u32 2, %s21
      %p238 = scmp.lt.s32.totalorder %s21, 0
      %s239 = scalar_select %p238, %s21, 0
      %s240 = smul.addr %s239, 4
      %s241 = scalar_lea.vmem %s2, %s240
      %p242 = scmp.lt.s32.totalorder %s20, 1
      %s243 = scalar_select %p242, %s20, 1
      %s244 = smul.addr %s243, 3
      %s245 = smul.addr %s244, 8
      %s246 = scalar_lea.vmem %s4, %s245
      %p248 = scmp.eq.s32.totalorder %s21, 0
      // Predicated region
      $region37: #{conv2d_module_forward.1} parent=35 // pred_check
        %p249 = pneg %p248
      $region38: #{conv2d_module_forward.1} parent=35 // pred_check_branch
        %251 = sbr.rel (%p249) target = $region40
      $region39: #{conv2d_module_forward.1} parent=35 // pred_region
        %252 = vst [vmem:[#allocation2] sm:$0xff] 0.0
        %253 = vst [vmem:[#allocation2 + $0x8] sm:$0xff] 0.0
        %vm254 = vcmask 261120
        %255 = vst.msk [vmem:[#allocation2 + $0x10] sm:$0xff] %vm254, 0.0
      $region40: #{conv2d_module_forward.1} parent=35 // pred_fallthru
        _
      %v256 = vld [vmem:[%s236] sm:$0xff]
      %v257 = vld [vmem:[%s236 + $0x8] sm:$0xf]
      %v258 = vld [vmem:[%s236 + $0xc] sm:$0xff]
      %v259 = vld [vmem:[%s236 + $0x14] sm:$0xf]
      %v260 = vld [vmem:[#allocation2] sm:$0xff]
      %v261 = vld [vmem:[#allocation2 + $0x8] sm:$0xff]
      %v262 = vld [vmem:[#allocation2 + $0x10] sm:$0xff]
      %v263 = vld [vmem:[%s241] sm:$0xf]
      %v268 = vunpack.c.l.b16 %v256
      %v269 = vunpack.c.h.b16 %v256
      %v270 = vunpack.c.l.b16 %v257
      %v271 = vunpack.c.l.b16 %v258
      %v272 = vunpack.c.h.b16 %v258
      %v273 = vunpack.c.l.b16 %v259
      %v274 = vpack.c.b16 %v271, %v268
      %v275 = vpack.c.b16 %v272, %v269
      %v276 = vpack.c.b16 %v273, %v270
      %vm280 = vcmask 130048
      %v282 = vsel %vm280, %v263, 0
      %284 = vmatprep.subr.bf16.mxu0 %v275
      %285 = vmatpush1.bf16.msra.mxu0 %v274
      %286 = vmatprep.subr.bf16.mxu0 0
      %287 = vmatpush1.bf16.msra.mxu0 0
      %288 = vmatprep.subr.bf16.mxu0 0
      %289 = vmatpush1.bf16.msra.mxu0 0
      %290 = vmatprep.subr.bf16.mxu0 0
      %291 = vmatpush1.bf16.msra.mxu0 0
      %292 = vmatprep.subr.bf16.mxu0 0
      %293 = vmatpush1.bf16.msra.mxu0 0
      %294 = vmatprep.subr.bf16.mxu0 0
      %295 = vmatpush1.bf16.msra.mxu0 0
      %296 = vmatprep.subr.bf16.mxu0 0
      %297 = vmatpush1.bf16.msra.mxu0 0
      %298 = vmatprep.subr.bf16.mxu0 0
      %299 = vmatpush1.bf16.msra.mxu0 0
      %300 = vmatprep.subr.bf16.mxu0 0
      %301 = vmatpush1.bf16.msra.mxu0 0
      %302 = vmatprep.subr.bf16.mxu0 0
      %303 = vmatpush1.bf16.msra.mxu0 0
      %304 = vmatprep.subr.bf16.mxu0 0
      %305 = vmatpush1.bf16.msra.mxu0 0
      %306 = vmatprep.subr.bf16.mxu0 0
      %307 = vmatpush1.bf16.msra.mxu0 0
      %308 = vmatprep.subr.bf16.mxu0 0
      %309 = vmatpush1.bf16.msra.mxu0 0
      %310 = vmatprep.subr.bf16.mxu0 0
      %311 = vmatpush1.bf16.msra.mxu0 0
      %312 = vmatprep.subr.bf16.mxu0 0
      %313 = vmatpush1.bf16.msra.mxu0 0
      %314 = vmatprep.subr.bf16.mxu0 0
      %315 = vmatpush1.bf16.msra.mxu0 0
      %316 = vmatprep.mubr.bf16.mxu0 0
      %317 = vmatmul.mubr.bf16.gmra.mrb[0].mxu0 %v282
      %v318 = vpop.f32.mrb[0].mxu0
      %v319 = vadd.f32 0.0, %v318
      %v320 = vpop.f32.mrb[0].mxu0
      %v321 = vadd.f32 0.0, %v320
      %v322 = vpop.f32.mrb[0].mxu0
      %v323 = vpop.f32.mrb[0].mxu0
      %324 = vdwg.mxu0
      %325 = vmatprep.subr.bf16.mxu0 0
      %326 = vmatpush1.bf16.msra.mxu0 %v276
      %327 = vmatprep.subr.bf16.mxu0 0
      %328 = vmatpush1.bf16.msra.mxu0 0
      %329 = vmatprep.subr.bf16.mxu0 0
      %330 = vmatpush1.bf16.msra.mxu0 0
      %331 = vmatprep.subr.bf16.mxu0 0
      %332 = vmatpush1.bf16.msra.mxu0 0
      %333 = vmatprep.subr.bf16.mxu0 0
      %334 = vmatpush1.bf16.msra.mxu0 0
      %335 = vmatprep.subr.bf16.mxu0 0
      %336 = vmatpush1.bf16.msra.mxu0 0
      %337 = vmatprep.subr.bf16.mxu0 0
      %338 = vmatpush1.bf16.msra.mxu0 0
      %339 = vmatprep.subr.bf16.mxu0 0
      %340 = vmatpush1.bf16.msra.mxu0 0
      %341 = vmatprep.subr.bf16.mxu0 0
      %342 = vmatpush1.bf16.msra.mxu0 0
      %343 = vmatprep.subr.bf16.mxu0 0
      %344 = vmatpush1.bf16.msra.mxu0 0
      %345 = vmatprep.subr.bf16.mxu0 0
      %346 = vmatpush1.bf16.msra.mxu0 0
      %347 = vmatprep.subr.bf16.mxu0 0
      %348 = vmatpush1.bf16.msra.mxu0 0
      %349 = vmatprep.subr.bf16.mxu0 0
      %350 = vmatpush1.bf16.msra.mxu0 0
      %351 = vmatprep.subr.bf16.mxu0 0
      %352 = vmatpush1.bf16.msra.mxu0 0
      %353 = vmatprep.subr.bf16.mxu0 0
      %354 = vmatpush1.bf16.msra.mxu0 0
      %355 = vmatprep.subr.bf16.mxu0 0
      %356 = vmatpush1.bf16.msra.mxu0 0
      %357 = vmatprep.mubr.bf16.mxu0 0
      %358 = vmatmul.mubr.bf16.gmra.mrb[0].mxu0 %v282
      %v359 = vpop.f32.mrb[0].mxu0
      %v360 = vadd.f32 0.0, %v359
      %v361 = vpop.f32.mrb[0].mxu0
      %v362 = vpop.f32.mrb[0].mxu0
      %v363 = vpop.f32.mrb[0].mxu0
      %364 = vdwg.mxu0
      %v365 = vadd.f32 %v260, %v319
      %v366 = vadd.f32 %v261, %v321
      %v367 = vadd.f32 %v262, %v360
      %s368 = scalar_lea.vmem %s241, 4
      %v369 = vld [vmem:[%s368] sm:$0xf]
      %v371 = vsel %vm280, %v369, 0
      %373 = vmatprep.subr.bf16.mxu0 %v275
      %374 = vmatpush1.bf16.msra.mxu0 %v274
      %375 = vmatprep.subr.bf16.mxu0 0
      %376 = vmatpush1.bf16.msra.mxu0 0
      %377 = vmatprep.subr.bf16.mxu0 0
      %378 = vmatpush1.bf16.msra.mxu0 0
      %379 = vmatprep.subr.bf16.mxu0 0
      %380 = vmatpush1.bf16.msra.mxu0 0
      %381 = vmatprep.subr.bf16.mxu0 0
      %382 = vmatpush1.bf16.msra.mxu0 0
      %383 = vmatprep.subr.bf16.mxu0 0
      %384 = vmatpush1.bf16.msra.mxu0 0
      %385 = vmatprep.subr.bf16.mxu0 0
      %386 = vmatpush1.bf16.msra.mxu0 0
      %387 = vmatprep.subr.bf16.mxu0 0
      %388 = vmatpush1.bf16.msra.mxu0 0
      %389 = vmatprep.subr.bf16.mxu0 0
      %390 = vmatpush1.bf16.msra.mxu0 0
      %391 = vmatprep.subr.bf16.mxu0 0
      %392 = vmatpush1.bf16.msra.mxu0 0
      %393 = vmatprep.subr.bf16.mxu0 0
      %394 = vmatpush1.bf16.msra.mxu0 0
      %395 = vmatprep.subr.bf16.mxu0 0
      %396 = vmatpush1.bf16.msra.mxu0 0
      %397 = vmatprep.subr.bf16.mxu0 0
      %398 = vmatpush1.bf16.msra.mxu0 0
      %399 = vmatprep.subr.bf16.mxu0 0
      %400 = vmatpush1.bf16.msra.mxu0 0
      %401 = vmatprep.subr.bf16.mxu0 0
      %402 = vmatpush1.bf16.msra.mxu0 0
      %403 = vmatprep.subr.bf16.mxu0 0
      %404 = vmatpush1.bf16.msra.mxu0 0
      %405 = vmatprep.mubr.bf16.mxu0 0
      %406 = vmatmul.mubr.bf16.gmra.mrb[0].mxu0 %v371
      %v407 = vpop.f32.mrb[0].mxu0
      %v408 = vadd.f32 0.0, %v407
      %v409 = vpop.f32.mrb[0].mxu0
      %v410 = vadd.f32 0.0, %v409
      %v411 = vpop.f32.mrb[0].mxu0
      %v412 = vpop.f32.mrb[0].mxu0
      %413 = vdwg.mxu0
      %414 = vmatprep.subr.bf16.mxu0 0
      %415 = vmatpush1.bf16.msra.mxu0 %v276
      %416 = vmatprep.subr.bf16.mxu0 0
      %417 = vmatpush1.bf16.msra.mxu0 0
      %418 = vmatprep.subr.bf16.mxu0 0
      %419 = vmatpush1.bf16.msra.mxu0 0
      %420 = vmatprep.subr.bf16.mxu0 0
      %421 = vmatpush1.bf16.msra.mxu0 0
      %422 = vmatprep.subr.bf16.mxu0 0
      %423 = vmatpush1.bf16.msra.mxu0 0
      %424 = vmatprep.subr.bf16.mxu0 0
      %425 = vmatpush1.bf16.msra.mxu0 0
      %426 = vmatprep.subr.bf16.mxu0 0
      %427 = vmatpush1.bf16.msra.mxu0 0
      %428 = vmatprep.subr.bf16.mxu0 0
      %429 = vmatpush1.bf16.msra.mxu0 0
      %430 = vmatprep.subr.bf16.mxu0 0
      %431 = vmatpush1.bf16.msra.mxu0 0
      %432 = vmatprep.subr.bf16.mxu0 0
      %433 = vmatpush1.bf16.msra.mxu0 0
      %434 = vmatprep.subr.bf16.mxu0 0
      %435 = vmatpush1.bf16.msra.mxu0 0
      %436 = vmatprep.subr.bf16.mxu0 0
      %437 = vmatpush1.bf16.msra.mxu0 0
      %438 = vmatprep.subr.bf16.mxu0 0
      %439 = vmatpush1.bf16.msra.mxu0 0
      %440 = vmatprep.subr.bf16.mxu0 0
      %441 = vmatpush1.bf16.msra.mxu0 0
      %442 = vmatprep.subr.bf16.mxu0 0
      %443 = vmatpush1.bf16.msra.mxu0 0
      %444 = vmatprep.subr.bf16.mxu0 0
      %445 = vmatpush1.bf16.msra.mxu0 0
      %446 = vmatprep.mubr.bf16.mxu0 0
      %447 = vmatmul.mubr.bf16.gmra.mrb[0].mxu0 %v371
      %v448 = vpop.f32.mrb[0].mxu0
      %v449 = vadd.f32 0.0, %v448
      %v450 = vpop.f32.mrb[0].mxu0
      %v451 = vpop.f32.mrb[0].mxu0
      %v452 = vpop.f32.mrb[0].mxu0
      %453 = vdwg.mxu0
      %457 = vrot.lane.b32.xlu0 %v408, 127
      %v458 = vpop.permute.xlu0 %457
      %459 = vrot.lane.b32.xlu0 %v410, 127
      %v460 = vpop.permute.xlu0 %459
      %461 = vrot.lane.b32.xlu0 %v449, 127
      %v462 = vpop.permute.xlu0 %461
      %vm463 = vcmask 1039360
      %v464 = vsel %vm463, %v458, %v460
      %v465 = vsel %vm463, %v460, %v462
      %v469 = vadd.f32 %v365, %v464
      %v470 = vadd.f32 %v366, %v465
      %v471 = vadd.f32 %v367, %v462
      %s472 = scalar_lea.vmem %s241, 8
      %v473 = vld [vmem:[%s472] sm:$0xf]
      %v475 = vsel %vm280, %v473, 0
      %477 = vmatprep.subr.bf16.mxu0 %v275
      %478 = vmatpush1.bf16.msra.mxu0 %v274
      %479 = vmatprep.subr.bf16.mxu0 0
      %480 = vmatpush1.bf16.msra.mxu0 0
      %481 = vmatprep.subr.bf16.mxu0 0
      %482 = vmatpush1.bf16.msra.mxu0 0
      %483 = vmatprep.subr.bf16.mxu0 0
      %484 = vmatpush1.bf16.msra.mxu0 0
      %485 = vmatprep.subr.bf16.mxu0 0
      %486 = vmatpush1.bf16.msra.mxu0 0
      %487 = vmatprep.subr.bf16.mxu0 0
      %488 = vmatpush1.bf16.msra.mxu0 0
      %489 = vmatprep.subr.bf16.mxu0 0
      %490 = vmatpush1.bf16.msra.mxu0 0
      %491 = vmatprep.subr.bf16.mxu0 0
      %492 = vmatpush1.bf16.msra.mxu0 0
      %493 = vmatprep.subr.bf16.mxu0 0
      %494 = vmatpush1.bf16.msra.mxu0 0
      %495 = vmatprep.subr.bf16.mxu0 0
      %496 = vmatpush1.bf16.msra.mxu0 0
      %497 = vmatprep.subr.bf16.mxu0 0
      %498 = vmatpush1.bf16.msra.mxu0 0
      %499 = vmatprep.subr.bf16.mxu0 0
      %500 = vmatpush1.bf16.msra.mxu0 0
      %501 = vmatprep.subr.bf16.mxu0 0
      %502 = vmatpush1.bf16.msra.mxu0 0
      %503 = vmatprep.subr.bf16.mxu0 0
      %504 = vmatpush1.bf16.msra.mxu0 0
      %505 = vmatprep.subr.bf16.mxu0 0
      %506 = vmatpush1.bf16.msra.mxu0 0
      %507 = vmatprep.subr.bf16.mxu0 0
      %508 = vmatpush1.bf16.msra.mxu0 0
      %509 = vmatprep.mubr.bf16.mxu0 0
      %510 = vmatmul.mubr.bf16.gmra.mrb[0].mxu0 %v475
      %v511 = vpop.f32.mrb[0].mxu0
      %v512 = vadd.f32 0.0, %v511
      %v513 = vpop.f32.mrb[0].mxu0
      %v514 = vadd.f32 0.0, %v513
      %v515 = vpop.f32.mrb[0].mxu0
      %v516 = vpop.f32.mrb[0].mxu0
      %517 = vdwg.mxu0
      %518 = vmatprep.subr.bf16.mxu0 0
      %519 = vmatpush1.bf16.msra.mxu0 %v276
      %520 = vmatprep.subr.bf16.mxu0 0
      %521 = vmatpush1.bf16.msra.mxu0 0
      %522 = vmatprep.subr.bf16.mxu0 0
      %523 = vmatpush1.bf16.msra.mxu0 0
      %524 = vmatprep.subr.bf16.mxu0 0
      %525 = vmatpush1.bf16.msra.mxu0 0
      %526 = vmatprep.subr.bf16.mxu0 0
      %527 = vmatpush1.bf16.msra.mxu0 0
      %528 = vmatprep.subr.bf16.mxu0 0
      %529 = vmatpush1.bf16.msra.mxu0 0
      %530 = vmatprep.subr.bf16.mxu0 0
      %531 = vmatpush1.bf16.msra.mxu0 0
      %532 = vmatprep.subr.bf16.mxu0 0
      %533 = vmatpush1.bf16.msra.mxu0 0
      %534 = vmatprep.subr.bf16.mxu0 0
      %535 = vmatpush1.bf16.msra.mxu0 0
      %536 = vmatprep.subr.bf16.mxu0 0
      %537 = vmatpush1.bf16.msra.mxu0 0
      %538 = vmatprep.subr.bf16.mxu0 0
      %539 = vmatpush1.bf16.msra.mxu0 0
      %540 = vmatprep.subr.bf16.mxu0 0
      %541 = vmatpush1.bf16.msra.mxu0 0
      %542 = vmatprep.subr.bf16.mxu0 0
      %543 = vmatpush1.bf16.msra.mxu0 0
      %544 = vmatprep.subr.bf16.mxu0 0
      %545 = vmatpush1.bf16.msra.mxu0 0
      %546 = vmatprep.subr.bf16.mxu0 0
      %547 = vmatpush1.bf16.msra.mxu0 0
      %548 = vmatprep.subr.bf16.mxu0 0
      %549 = vmatpush1.bf16.msra.mxu0 0
      %550 = vmatprep.mubr.bf16.mxu0 0
      %551 = vmatmul.mubr.bf16.gmra.mrb[0].mxu0 %v475
      %v552 = vpop.f32.mrb[0].mxu0
      %v553 = vadd.f32 0.0, %v552
      %v554 = vpop.f32.mrb[0].mxu0
      %v555 = vpop.f32.mrb[0].mxu0
      %v556 = vpop.f32.mrb[0].mxu0
      %557 = vdwg.mxu0
      %561 = vrot.lane.b32.xlu0 %v512, 126
      %v562 = vpop.permute.xlu0 %561
      %563 = vrot.lane.b32.xlu0 %v514, 126
      %v564 = vpop.permute.xlu0 %563
      %565 = vrot.lane.b32.xlu0 %v553, 126
      %v566 = vpop.permute.xlu0 %565
      %vm567 = vcmask 1031168
      %v568 = vsel %vm567, %v562, %v564
      %v569 = vsel %vm567, %v564, %v566
      %v573 = vadd.f32 %v469, %v568
      %v574 = vadd.f32 %v470, %v569
      %v575 = vadd.f32 %v471, %v566
      %s576 = scalar_lea.vmem %s241, 12
      %v577 = vld [vmem:[%s576] sm:$0xf]
      %v579 = vsel %vm280, %v577, 0
      %581 = vmatprep.subr.bf16.mxu0 %v275
      %582 = vmatpush1.bf16.msra.mxu0 %v274
      %583 = vmatprep.subr.bf16.mxu0 0
      %584 = vmatpush1.bf16.msra.mxu0 0
      %585 = vmatprep.subr.bf16.mxu0 0
      %586 = vmatpush1.bf16.msra.mxu0 0
      %587 = vmatprep.subr.bf16.mxu0 0
      %588 = vmatpush1.bf16.msra.mxu0 0
      %589 = vmatprep.subr.bf16.mxu0 0
      %590 = vmatpush1.bf16.msra.mxu0 0
      %591 = vmatprep.subr.bf16.mxu0 0
      %592 = vmatpush1.bf16.msra.mxu0 0
      %593 = vmatprep.subr.bf16.mxu0 0
      %594 = vmatpush1.bf16.msra.mxu0 0
      %595 = vmatprep.subr.bf16.mxu0 0
      %596 = vmatpush1.bf16.msra.mxu0 0
      %597 = vmatprep.subr.bf16.mxu0 0
      %598 = vmatpush1.bf16.msra.mxu0 0
      %599 = vmatprep.subr.bf16.mxu0 0
      %600 = vmatpush1.bf16.msra.mxu0 0
      %601 = vmatprep.subr.bf16.mxu0 0
      %602 = vmatpush1.bf16.msra.mxu0 0
      %603 = vmatprep.subr.bf16.mxu0 0
      %604 = vmatpush1.bf16.msra.mxu0 0
      %605 = vmatprep.subr.bf16.mxu0 0
      %606 = vmatpush1.bf16.msra.mxu0 0
      %607 = vmatprep.subr.bf16.mxu0 0
      %608 = vmatpush1.bf16.msra.mxu0 0
      %609 = vmatprep.subr.bf16.mxu0 0
      %610 = vmatpush1.bf16.msra.mxu0 0
      %611 = vmatprep.subr.bf16.mxu0 0
      %612 = vmatpush1.bf16.msra.mxu0 0
      %613 = vmatprep.mubr.bf16.mxu0 0
      %614 = vmatmul.mubr.bf16.gmra.mrb[0].mxu0 %v579
      %v615 = vpop.f32.mrb[0].mxu0
      %v616 = vadd.f32 0.0, %v615
      %v617 = vpop.f32.mrb[0].mxu0
      %v618 = vadd.f32 0.0, %v617
      %v619 = vpop.f32.mrb[0].mxu0
      %v620 = vpop.f32.mrb[0].mxu0
      %621 = vdwg.mxu0
      %622 = vmatprep.subr.bf16.mxu0 0
      %623 = vmatpush1.bf16.msra.mxu0 %v276
      %624 = vmatprep.subr.bf16.mxu0 0
      %625 = vmatpush1.bf16.msra.mxu0 0
      %626 = vmatprep.subr.bf16.mxu0 0
      %627 = vmatpush1.bf16.msra.mxu0 0
      %628 = vmatprep.subr.bf16.mxu0 0
      %629 = vmatpush1.bf16.msra.mxu0 0
      %630 = vmatprep.subr.bf16.mxu0 0
      %631 = vmatpush1.bf16.msra.mxu0 0
      %632 = vmatprep.subr.bf16.mxu0 0
      %633 = vmatpush1.bf16.msra.mxu0 0
      %634 = vmatprep.subr.bf16.mxu0 0
      %635 = vmatpush1.bf16.msra.mxu0 0
      %636 = vmatprep.subr.bf16.mxu0 0
      %637 = vmatpush1.bf16.msra.mxu0 0
      %638 = vmatprep.subr.bf16.mxu0 0
      %639 = vmatpush1.bf16.msra.mxu0 0
      %640 = vmatprep.subr.bf16.mxu0 0
      %641 = vmatpush1.bf16.msra.mxu0 0
      %642 = vmatprep.subr.bf16.mxu0 0
      %643 = vmatpush1.bf16.msra.mxu0 0
      %644 = vmatprep.subr.bf16.mxu0 0
      %645 = vmatpush1.bf16.msra.mxu0 0
      %646 = vmatprep.subr.bf16.mxu0 0
      %647 = vmatpush1.bf16.msra.mxu0 0
      %648 = vmatprep.subr.bf16.mxu0 0
      %649 = vmatpush1.bf16.msra.mxu0 0
      %650 = vmatprep.subr.bf16.mxu0 0
      %651 = vmatpush1.bf16.msra.mxu0 0
      %652 = vmatprep.subr.bf16.mxu0 0
      %653 = vmatpush1.bf16.msra.mxu0 0
      %654 = vmatprep.mubr.bf16.mxu0 0
      %655 = vmatmul.mubr.bf16.gmra.mrb[0].mxu0 %v579
      %v656 = vpop.f32.mrb[0].mxu0
      %v657 = vadd.f32 0.0, %v656
      %v658 = vpop.f32.mrb[0].mxu0
      %v659 = vpop.f32.mrb[0].mxu0
      %v660 = vpop.f32.mrb[0].mxu0
      %661 = vdwg.mxu0
      %665 = vrot.lane.b32.xlu0 %v616, 110
      %v666 = vpop.permute.xlu0 %665
      %667 = vrot.lane.b32.xlu0 %v618, 110
      %v668 = vpop.permute.xlu0 %667
      %669 = vrot.lane.b32.xlu0 %v657, 110
      %v670 = vpop.permute.xlu0 %669
      %vm671 = vcmask 900096
      %v672 = vsel %vm671, %v666, %v668
      %v673 = vsel %vm671, %v668, %v670
      %v677 = vadd.f32 %v573, %v672
      %v678 = vadd.f32 %v574, %v673
      %v679 = vadd.f32 %v575, %v670
      %s680 = scalar_lea.vmem %s241, 16
      %v681 = vld [vmem:[%s680] sm:$0xf]
      %v683 = vsel %vm280, %v681, 0
      %685 = vmatprep.subr.bf16.mxu0 %v275
      %686 = vmatpush1.bf16.msra.mxu0 %v274
      %687 = vmatprep.subr.bf16.mxu0 0
      %688 = vmatpush1.bf16.msra.mxu0 0
      %689 = vmatprep.subr.bf16.mxu0 0
      %690 = vmatpush1.bf16.msra.mxu0 0
      %691 = vmatprep.subr.bf16.mxu0 0
      %692 = vmatpush1.bf16.msra.mxu0 0
      %693 = vmatprep.subr.bf16.mxu0 0
      %694 = vmatpush1.bf16.msra.mxu0 0
      %695 = vmatprep.subr.bf16.mxu0 0
      %696 = vmatpush1.bf16.msra.mxu0 0
      %697 = vmatprep.subr.bf16.mxu0 0
      %698 = vmatpush1.bf16.msra.mxu0 0
      %699 = vmatprep.subr.bf16.mxu0 0
      %700 = vmatpush1.bf16.msra.mxu0 0
      %701 = vmatprep.subr.bf16.mxu0 0
      %702 = vmatpush1.bf16.msra.mxu0 0
      %703 = vmatprep.subr.bf16.mxu0 0
      %704 = vmatpush1.bf16.msra.mxu0 0
      %705 = vmatprep.subr.bf16.mxu0 0
      %706 = vmatpush1.bf16.msra.mxu0 0
      %707 = vmatprep.subr.bf16.mxu0 0
      %708 = vmatpush1.bf16.msra.mxu0 0
      %709 = vmatprep.subr.bf16.mxu0 0
      %710 = vmatpush1.bf16.msra.mxu0 0
      %711 = vmatprep.subr.bf16.mxu0 0
      %712 = vmatpush1.bf16.msra.mxu0 0
      %713 = vmatprep.subr.bf16.mxu0 0
      %714 = vmatpush1.bf16.msra.mxu0 0
      %715 = vmatprep.subr.bf16.mxu0 0
      %716 = vmatpush1.bf16.msra.mxu0 0
      %717 = vmatprep.mubr.bf16.mxu0 0
      %718 = vmatmul.mubr.bf16.gmra.mrb[0].mxu0 %v683
      %v719 = vpop.f32.mrb[0].mxu0
      %v720 = vadd.f32 0.0, %v719
      %v721 = vpop.f32.mrb[0].mxu0
      %v722 = vadd.f32 0.0, %v721
      %v723 = vpop.f32.mrb[0].mxu0
      %v724 = vpop.f32.mrb[0].mxu0
      %725 = vdwg.mxu0
      %726 = vmatprep.subr.bf16.mxu0 0
      %727 = vmatpush1.bf16.msra.mxu0 %v276
      %728 = vmatprep.subr.bf16.mxu0 0
      %729 = vmatpush1.bf16.msra.mxu0 0
      %730 = vmatprep.subr.bf16.mxu0 0
      %731 = vmatpush1.bf16.msra.mxu0 0
      %732 = vmatprep.subr.bf16.mxu0 0
      %733 = vmatpush1.bf16.msra.mxu0 0
      %734 = vmatprep.subr.bf16.mxu0 0
      %735 = vmatpush1.bf16.msra.mxu0 0
      %736 = vmatprep.subr.bf16.mxu0 0
      %737 = vmatpush1.bf16.msra.mxu0 0
      %738 = vmatprep.subr.bf16.mxu0 0
      %739 = vmatpush1.bf16.msra.mxu0 0
      %740 = vmatprep.subr.bf16.mxu0 0
      %741 = vmatpush1.bf16.msra.mxu0 0
      %742 = vmatprep.subr.bf16.mxu0 0
      %743 = vmatpush1.bf16.msra.mxu0 0
      %744 = vmatprep.subr.bf16.mxu0 0
      %745 = vmatpush1.bf16.msra.mxu0 0
      %746 = vmatprep.subr.bf16.mxu0 0
      %747 = vmatpush1.bf16.msra.mxu0 0
      %748 = vmatprep.subr.bf16.mxu0 0
      %749 = vmatpush1.bf16.msra.mxu0 0
      %750 = vmatprep.subr.bf16.mxu0 0
      %751 = vmatpush1.bf16.msra.mxu0 0
      %752 = vmatprep.subr.bf16.mxu0 0
      %753 = vmatpush1.bf16.msra.mxu0 0
      %754 = vmatprep.subr.bf16.mxu0 0
      %755 = vmatpush1.bf16.msra.mxu0 0
      %756 = vmatprep.subr.bf16.mxu0 0
      %757 = vmatpush1.bf16.msra.mxu0 0
      %758 = vmatprep.mubr.bf16.mxu0 0
      %759 = vmatmul.mubr.bf16.gmra.mrb[0].mxu0 %v683
      %v760 = vpop.f32.mrb[0].mxu0
      %v761 = vadd.f32 0.0, %v760
      %v762 = vpop.f32.mrb[0].mxu0
      %v763 = vpop.f32.mrb[0].mxu0
      %v764 = vpop.f32.mrb[0].mxu0
      %765 = vdwg.mxu0
      %769 = vrot.lane.b32.xlu0 %v720, 109
      %v770 = vpop.permute.xlu0 %769
      %771 = vrot.lane.b32.xlu0 %v722, 109
      %v772 = vpop.permute.xlu0 %771
      %773 = vrot.lane.b32.xlu0 %v761, 109
      %v774 = vpop.permute.xlu0 %773
      %vm775 = vcmask 891904
      %v776 = vsel %vm775, %v770, %v772
      %v777 = vsel %vm775, %v772, %v774
      %v781 = vadd.f32 %v677, %v776
      %v782 = vadd.f32 %v678, %v777
      %v783 = vadd.f32 %v679, %v774
      %s784 = scalar_lea.vmem %s241, 20
      %v785 = vld [vmem:[%s784] sm:$0xf]
      %v787 = vsel %vm280, %v785, 0
      %789 = vmatprep.subr.bf16.mxu0 %v275
      %790 = vmatpush1.bf16.msra.mxu0 %v274
      %791 = vmatprep.subr.bf16.mxu0 0
      %792 = vmatpush1.bf16.msra.mxu0 0
      %793 = vmatprep.subr.bf16.mxu0 0
      %794 = vmatpush1.bf16.msra.mxu0 0
      %795 = vmatprep.subr.bf16.mxu0 0
      %796 = vmatpush1.bf16.msra.mxu0 0
      %797 = vmatprep.subr.bf16.mxu0 0
      %798 = vmatpush1.bf16.msra.mxu0 0
      %799 = vmatprep.subr.bf16.mxu0 0
      %800 = vmatpush1.bf16.msra.mxu0 0
      %801 = vmatprep.subr.bf16.mxu0 0
      %802 = vmatpush1.bf16.msra.mxu0 0
      %803 = vmatprep.subr.bf16.mxu0 0
      %804 = vmatpush1.bf16.msra.mxu0 0
      %805 = vmatprep.subr.bf16.mxu0 0
      %806 = vmatpush1.bf16.msra.mxu0 0
      %807 = vmatprep.subr.bf16.mxu0 0
      %808 = vmatpush1.bf16.msra.mxu0 0
      %809 = vmatprep.subr.bf16.mxu0 0
      %810 = vmatpush1.bf16.msra.mxu0 0
      %811 = vmatprep.subr.bf16.mxu0 0
      %812 = vmatpush1.bf16.msra.mxu0 0
      %813 = vmatprep.subr.bf16.mxu0 0
      %814 = vmatpush1.bf16.msra.mxu0 0
      %815 = vmatprep.subr.bf16.mxu0 0
      %816 = vmatpush1.bf16.msra.mxu0 0
      %817 = vmatprep.subr.bf16.mxu0 0
      %818 = vmatpush1.bf16.msra.mxu0 0
      %819 = vmatprep.subr.bf16.mxu0 0
      %820 = vmatpush1.bf16.msra.mxu0 0
      %821 = vmatprep.mubr.bf16.mxu0 0
      %822 = vmatmul.mubr.bf16.gmra.mrb[0].mxu0 %v787
      %v823 = vpop.f32.mrb[0].mxu0
      %v824 = vadd.f32 0.0, %v823
      %v825 = vpop.f32.mrb[0].mxu0
      %v826 = vadd.f32 0.0, %v825
      %v827 = vpop.f32.mrb[0].mxu0
      %v828 = vpop.f32.mrb[0].mxu0
      %829 = vdwg.mxu0
      %830 = vmatprep.subr.bf16.mxu0 0
      %831 = vmatpush1.bf16.msra.mxu0 %v276
      %832 = vmatprep.subr.bf16.mxu0 0
      %833 = vmatpush1.bf16.msra.mxu0 0
      %834 = vmatprep.subr.bf16.mxu0 0
      %835 = vmatpush1.bf16.msra.mxu0 0
      %836 = vmatprep.subr.bf16.mxu0 0
      %837 = vmatpush1.bf16.msra.mxu0 0
      %838 = vmatprep.subr.bf16.mxu0 0
      %839 = vmatpush1.bf16.msra.mxu0 0
      %840 = vmatprep.subr.bf16.mxu0 0
      %841 = vmatpush1.bf16.msra.mxu0 0
      %842 = vmatprep.subr.bf16.mxu0 0
      %843 = vmatpush1.bf16.msra.mxu0 0
      %844 = vmatprep.subr.bf16.mxu0 0
      %845 = vmatpush1.bf16.msra.mxu0 0
      %846 = vmatprep.subr.bf16.mxu0 0
      %847 = vmatpush1.bf16.msra.mxu0 0
      %848 = vmatprep.subr.bf16.mxu0 0
      %849 = vmatpush1.bf16.msra.mxu0 0
      %850 = vmatprep.subr.bf16.mxu0 0
      %851 = vmatpush1.bf16.msra.mxu0 0
      %852 = vmatprep.subr.bf16.mxu0 0
      %853 = vmatpush1.bf16.msra.mxu0 0
      %854 = vmatprep.subr.bf16.mxu0 0
      %855 = vmatpush1.bf16.msra.mxu0 0
      %856 = vmatprep.subr.bf16.mxu0 0
      %857 = vmatpush1.bf16.msra.mxu0 0
      %858 = vmatprep.subr.bf16.mxu0 0
      %859 = vmatpush1.bf16.msra.mxu0 0
      %860 = vmatprep.subr.bf16.mxu0 0
      %861 = vmatpush1.bf16.msra.mxu0 0
      %862 = vmatprep.mubr.bf16.mxu0 0
      %863 = vmatmul.mubr.bf16.gmra.mrb[0].mxu0 %v787
      %v864 = vpop.f32.mrb[0].mxu0
      %v865 = vadd.f32 0.0, %v864
      %v866 = vpop.f32.mrb[0].mxu0
      %v867 = vpop.f32.mrb[0].mxu0
      %v868 = vpop.f32.mrb[0].mxu0
      %869 = vdwg.mxu0
      %873 = vrot.lane.b32.xlu0 %v824, 108
      %v874 = vpop.permute.xlu0 %873
      %875 = vrot.lane.b32.xlu0 %v826, 108
      %v876 = vpop.permute.xlu0 %875
      %877 = vrot.lane.b32.xlu0 %v865, 108
      %v878 = vpop.permute.xlu0 %877
      %vm879 = vcmask 883712
      %v880 = vsel %vm879, %v874, %v876
      %v881 = vsel %vm879, %v876, %v878
      %v885 = vadd.f32 %v781, %v880
      %v886 = vadd.f32 %v782, %v881
      %v887 = vadd.f32 %v783, %v878
      %s888 = scalar_lea.vmem %s241, 24
      %v889 = vld [vmem:[%s888] sm:$0xf]
      %v891 = vsel %vm280, %v889, 0
      %893 = vmatprep.subr.bf16.mxu0 %v275
      %894 = vmatpush1.bf16.msra.mxu0 %v274
      %895 = vmatprep.subr.bf16.mxu0 0
      %896 = vmatpush1.bf16.msra.mxu0 0
      %897 = vmatprep.subr.bf16.mxu0 0
      %898 = vmatpush1.bf16.msra.mxu0 0
      %899 = vmatprep.subr.bf16.mxu0 0
      %900 = vmatpush1.bf16.msra.mxu0 0
      %901 = vmatprep.subr.bf16.mxu0 0
      %902 = vmatpush1.bf16.msra.mxu0 0
      %903 = vmatprep.subr.bf16.mxu0 0
      %904 = vmatpush1.bf16.msra.mxu0 0
      %905 = vmatprep.subr.bf16.mxu0 0
      %906 = vmatpush1.bf16.msra.mxu0 0
      %907 = vmatprep.subr.bf16.mxu0 0
      %908 = vmatpush1.bf16.msra.mxu0 0
      %909 = vmatprep.subr.bf16.mxu0 0
      %910 = vmatpush1.bf16.msra.mxu0 0
      %911 = vmatprep.subr.bf16.mxu0 0
      %912 = vmatpush1.bf16.msra.mxu0 0
      %913 = vmatprep.subr.bf16.mxu0 0
      %914 = vmatpush1.bf16.msra.mxu0 0
      %915 = vmatprep.subr.bf16.mxu0 0
      %916 = vmatpush1.bf16.msra.mxu0 0
      %917 = vmatprep.subr.bf16.mxu0 0
      %918 = vmatpush1.bf16.msra.mxu0 0
      %919 = vmatprep.subr.bf16.mxu0 0
      %920 = vmatpush1.bf16.msra.mxu0 0
      %921 = vmatprep.subr.bf16.mxu0 0
      %922 = vmatpush1.bf16.msra.mxu0 0
      %923 = vmatprep.subr.bf16.mxu0 0
      %924 = vmatpush1.bf16.msra.mxu0 0
      %925 = vmatprep.mubr.bf16.mxu0 0
      %926 = vmatmul.mubr.bf16.gmra.mrb[0].mxu0 %v891
      %v927 = vpop.f32.mrb[0].mxu0
      %v928 = vadd.f32 0.0, %v927
      %v929 = vpop.f32.mrb[0].mxu0
      %v930 = vadd.f32 0.0, %v929
      %v931 = vpop.f32.mrb[0].mxu0
      %v932 = vpop.f32.mrb[0].mxu0
      %933 = vdwg.mxu0
      %934 = vmatprep.subr.bf16.mxu0 0
      %935 = vmatpush1.bf16.msra.mxu0 %v276
      %936 = vmatprep.subr.bf16.mxu0 0
      %937 = vmatpush1.bf16.msra.mxu0 0
      %938 = vmatprep.subr.bf16.mxu0 0
      %939 = vmatpush1.bf16.msra.mxu0 0
      %940 = vmatprep.subr.bf16.mxu0 0
      %941 = vmatpush1.bf16.msra.mxu0 0
      %942 = vmatprep.subr.bf16.mxu0 0
      %943 = vmatpush1.bf16.msra.mxu0 0
      %944 = vmatprep.subr.bf16.mxu0 0
      %945 = vmatpush1.bf16.msra.mxu0 0
      %946 = vmatprep.subr.bf16.mxu0 0
      %947 = vmatpush1.bf16.msra.mxu0 0
      %948 = vmatprep.subr.bf16.mxu0 0
      %949 = vmatpush1.bf16.msra.mxu0 0
      %950 = vmatprep.subr.bf16.mxu0 0
      %951 = vmatpush1.bf16.msra.mxu0 0
      %952 = vmatprep.subr.bf16.mxu0 0
      %953 = vmatpush1.bf16.msra.mxu0 0
      %954 = vmatprep.subr.bf16.mxu0 0
      %955 = vmatpush1.bf16.msra.mxu0 0
      %956 = vmatprep.subr.bf16.mxu0 0
      %957 = vmatpush1.bf16.msra.mxu0 0
      %958 = vmatprep.subr.bf16.mxu0 0
      %959 = vmatpush1.bf16.msra.mxu0 0
      %960 = vmatprep.subr.bf16.mxu0 0
      %961 = vmatpush1.bf16.msra.mxu0 0
      %962 = vmatprep.subr.bf16.mxu0 0
      %963 = vmatpush1.bf16.msra.mxu0 0
      %964 = vmatprep.subr.bf16.mxu0 0
      %965 = vmatpush1.bf16.msra.mxu0 0
      %966 = vmatprep.mubr.bf16.mxu0 0
      %967 = vmatmul.mubr.bf16.gmra.mrb[0].mxu0 %v891
      %v968 = vpop.f32.mrb[0].mxu0
      %v969 = vadd.f32 0.0, %v968
      %v970 = vpop.f32.mrb[0].mxu0
      %v971 = vpop.f32.mrb[0].mxu0
      %v972 = vpop.f32.mrb[0].mxu0
      %973 = vdwg.mxu0
      %977 = vrot.lane.b32.xlu0 %v928, 92
      %v978 = vpop.permute.xlu0 %977
      %979 = vrot.lane.b32.xlu0 %v930, 92
      %v980 = vpop.permute.xlu0 %979
      %981 = vrot.lane.b32.xlu0 %v969, 92
      %v982 = vpop.permute.xlu0 %981
      %vm983 = vcmask 752640
      %v984 = vsel %vm983, %v978, %v980
      %v985 = vsel %vm983, %v980, %v982
      %v989 = vadd.f32 %v885, %v984
      %v990 = vadd.f32 %v886, %v985
      %v991 = vadd.f32 %v887, %v982
      %s992 = scalar_lea.vmem %s241, 28
      %v993 = vld [vmem:[%s992] sm:$0xf]
      %v995 = vsel %vm280, %v993, 0
      %997 = vmatprep.subr.bf16.mxu0 %v275
      %998 = vmatpush1.bf16.msra.mxu0 %v274
      %999 = vmatprep.subr.bf16.mxu0 0
      %1000 = vmatpush1.bf16.msra.mxu0 0
      %1001 = vmatprep.subr.bf16.mxu0 0
      %1002 = vmatpush1.bf16.msra.mxu0 0
      %1003 = vmatprep.subr.bf16.mxu0 0
      %1004 = vmatpush1.bf16.msra.mxu0 0
      %1005 = vmatprep.subr.bf16.mxu0 0
      %1006 = vmatpush1.bf16.msra.mxu0 0
      %1007 = vmatprep.subr.bf16.mxu0 0
      %1008 = vmatpush1.bf16.msra.mxu0 0
      %1009 = vmatprep.subr.bf16.mxu0 0
      %1010 = vmatpush1.bf16.msra.mxu0 0
      %1011 = vmatprep.subr.bf16.mxu0 0
      %1012 = vmatpush1.bf16.msra.mxu0 0
      %1013 = vmatprep.subr.bf16.mxu0 0
      %1014 = vmatpush1.bf16.msra.mxu0 0
      %1015 = vmatprep.subr.bf16.mxu0 0
      %1016 = vmatpush1.bf16.msra.mxu0 0
      %1017 = vmatprep.subr.bf16.mxu0 0
      %1018 = vmatpush1.bf16.msra.mxu0 0
      %1019 = vmatprep.subr.bf16.mxu0 0
      %1020 = vmatpush1.bf16.msra.mxu0 0
      %1021 = vmatprep.subr.bf16.mxu0 0
      %1022 = vmatpush1.bf16.msra.mxu0 0
      %1023 = vmatprep.subr.bf16.mxu0 0
      %1024 = vmatpush1.bf16.msra.mxu0 0
      %1025 = vmatprep.subr.bf16.mxu0 0
      %1026 = vmatpush1.bf16.msra.mxu0 0
      %1027 = vmatprep.subr.bf16.mxu0 0
      %1028 = vmatpush1.bf16.msra.mxu0 0
      %1029 = vmatprep.mubr.bf16.mxu0 0
      %1030 = vmatmul.mubr.bf16.gmra.mrb[0].mxu0 %v995
      %v1031 = vpop.f32.mrb[0].mxu0
      %v1032 = vadd.f32 0.0, %v1031
      %v1033 = vpop.f32.mrb[0].mxu0
      %v1034 = vadd.f32 0.0, %v1033
      %v1035 = vpop.f32.mrb[0].mxu0
      %v1036 = vpop.f32.mrb[0].mxu0
      %1037 = vdwg.mxu0
      %1038 = vmatprep.subr.bf16.mxu0 0
      %1039 = vmatpush1.bf16.msra.mxu0 %v276
      %1040 = vmatprep.subr.bf16.mxu0 0
      %1041 = vmatpush1.bf16.msra.mxu0 0
      %1042 = vmatprep.subr.bf16.mxu0 0
      %1043 = vmatpush1.bf16.msra.mxu0 0
      %1044 = vmatprep.subr.bf16.mxu0 0
      %1045 = vmatpush1.bf16.msra.mxu0 0
      %1046 = vmatprep.subr.bf16.mxu0 0
      %1047 = vmatpush1.bf16.msra.mxu0 0
      %1048 = vmatprep.subr.bf16.mxu0 0
      %1049 = vmatpush1.bf16.msra.mxu0 0
      %1050 = vmatprep.subr.bf16.mxu0 0
      %1051 = vmatpush1.bf16.msra.mxu0 0
      %1052 = vmatprep.subr.bf16.mxu0 0
      %1053 = vmatpush1.bf16.msra.mxu0 0
      %1054 = vmatprep.subr.bf16.mxu0 0
      %1055 = vmatpush1.bf16.msra.mxu0 0
      %1056 = vmatprep.subr.bf16.mxu0 0
      %1057 = vmatpush1.bf16.msra.mxu0 0
      %1058 = vmatprep.subr.bf16.mxu0 0
      %1059 = vmatpush1.bf16.msra.mxu0 0
      %1060 = vmatprep.subr.bf16.mxu0 0
      %1061 = vmatpush1.bf16.msra.mxu0 0
      %1062 = vmatprep.subr.bf16.mxu0 0
      %1063 = vmatpush1.bf16.msra.mxu0 0
      %1064 = vmatprep.subr.bf16.mxu0 0
      %1065 = vmatpush1.bf16.msra.mxu0 0
      %1066 = vmatprep.subr.bf16.mxu0 0
      %1067 = vmatpush1.bf16.msra.mxu0 0
      %1068 = vmatprep.subr.bf16.mxu0 0
      %1069 = vmatpush1.bf16.msra.mxu0 0
      %1070 = vmatprep.mubr.bf16.mxu0 0
      %1071 = vmatmul.mubr.bf16.gmra.mrb[0].mxu0 %v995
      %v1072 = vpop.f32.mrb[0].mxu0
      %v1073 = vadd.f32 0.0, %v1072
      %v1074 = vpop.f32.mrb[0].mxu0
      %v1075 = vpop.f32.mrb[0].mxu0
      %v1076 = vpop.f32.mrb[0].mxu0
      %1077 = vdwg.mxu0
      %1081 = vrot.lane.b32.xlu0 %v1032, 91
      %v1082 = vpop.permute.xlu0 %1081
      %1083 = vrot.lane.b32.xlu0 %v1034, 91
      %v1084 = vpop.permute.xlu0 %1083
      %1085 = vrot.lane.b32.xlu0 %v1073, 91
      %v1086 = vpop.permute.xlu0 %1085
      %vm1087 = vcmask 744448
      %v1088 = vsel %vm1087, %v1082, %v1084
      %v1089 = vsel %vm1087, %v1084, %v1086
      %v1093 = vadd.f32 %v989, %v1088
      %v1094 = vadd.f32 %v990, %v1089
      %v1095 = vadd.f32 %v991, %v1086
      %s1096 = scalar_lea.vmem %s241, 32
      %v1097 = vld [vmem:[%s1096] sm:$0xf]
      %v1099 = vsel %vm280, %v1097, 0
      %1101 = vmatprep.subr.bf16.mxu0 %v275
      %1102 = vmatpush1.bf16.msra.mxu0 %v274
      %1103 = vmatprep.subr.bf16.mxu0 0
      %1104 = vmatpush1.bf16.msra.mxu0 0
      %1105 = vmatprep.subr.bf16.mxu0 0
      %1106 = vmatpush1.bf16.msra.mxu0 0
      %1107 = vmatprep.subr.bf16.mxu0 0
      %1108 = vmatpush1.bf16.msra.mxu0 0
      %1109 = vmatprep.subr.bf16.mxu0 0
      %1110 = vmatpush1.bf16.msra.mxu0 0
      %1111 = vmatprep.subr.bf16.mxu0 0
      %1112 = vmatpush1.bf16.msra.mxu0 0
      %1113 = vmatprep.subr.bf16.mxu0 0
      %1114 = vmatpush1.bf16.msra.mxu0 0
      %1115 = vmatprep.subr.bf16.mxu0 0
      %1116 = vmatpush1.bf16.msra.mxu0 0
      %1117 = vmatprep.subr.bf16.mxu0 0
      %1118 = vmatpush1.bf16.msra.mxu0 0
      %1119 = vmatprep.subr.bf16.mxu0 0
      %1120 = vmatpush1.bf16.msra.mxu0 0
      %1121 = vmatprep.subr.bf16.mxu0 0
      %1122 = vmatpush1.bf16.msra.mxu0 0
      %1123 = vmatprep.subr.bf16.mxu0 0
      %1124 = vmatpush1.bf16.msra.mxu0 0
      %1125 = vmatprep.subr.bf16.mxu0 0
      %1126 = vmatpush1.bf16.msra.mxu0 0
      %1127 = vmatprep.subr.bf16.mxu0 0
      %1128 = vmatpush1.bf16.msra.mxu0 0
      %1129 = vmatprep.subr.bf16.mxu0 0
      %1130 = vmatpush1.bf16.msra.mxu0 0
      %1131 = vmatprep.subr.bf16.mxu0 0
      %1132 = vmatpush1.bf16.msra.mxu0 0
      %1133 = vmatprep.mubr.bf16.mxu0 0
      %1134 = vmatmul.mubr.bf16.gmra.mrb[0].mxu0 %v1099
      %v1135 = vpop.f32.mrb[0].mxu0
      %v1136 = vadd.f32 0.0, %v1135
      %v1137 = vpop.f32.mrb[0].mxu0
      %v1138 = vadd.f32 0.0, %v1137
      %v1139 = vpop.f32.mrb[0].mxu0
      %v1140 = vpop.f32.mrb[0].mxu0
      %1141 = vdwg.mxu0
      %1142 = vmatprep.subr.bf16.mxu0 0
      %1143 = vmatpush1.bf16.msra.mxu0 %v276
      %1144 = vmatprep.subr.bf16.mxu0 0
      %1145 = vmatpush1.bf16.msra.mxu0 0
      %1146 = vmatprep.subr.bf16.mxu0 0
      %1147 = vmatpush1.bf16.msra.mxu0 0
      %1148 = vmatprep.subr.bf16.mxu0 0
      %1149 = vmatpush1.bf16.msra.mxu0 0
      %1150 = vmatprep.subr.bf16.mxu0 0
      %1151 = vmatpush1.bf16.msra.mxu0 0
      %1152 = vmatprep.subr.bf16.mxu0 0
      %1153 = vmatpush1.bf16.msra.mxu0 0
      %1154 = vmatprep.subr.bf16.mxu0 0
      %1155 = vmatpush1.bf16.msra.mxu0 0
      %1156 = vmatprep.subr.bf16.mxu0 0
      %1157 = vmatpush1.bf16.msra.mxu0 0
      %1158 = vmatprep.subr.bf16.mxu0 0
      %1159 = vmatpush1.bf16.msra.mxu0 0
      %1160 = vmatprep.subr.bf16.mxu0 0
      %1161 = vmatpush1.bf16.msra.mxu0 0
      %1162 = vmatprep.subr.bf16.mxu0 0
      %1163 = vmatpush1.bf16.msra.mxu0 0
      %1164 = vmatprep.subr.bf16.mxu0 0
      %1165 = vmatpush1.bf16.msra.mxu0 0
      %1166 = vmatprep.subr.bf16.mxu0 0
      %1167 = vmatpush1.bf16.msra.mxu0 0
      %1168 = vmatprep.subr.bf16.mxu0 0
      %1169 = vmatpush1.bf16.msra.mxu0 0
      %1170 = vmatprep.subr.bf16.mxu0 0
      %1171 = vmatpush1.bf16.msra.mxu0 0
      %1172 = vmatprep.subr.bf16.mxu0 0
      %1173 = vmatpush1.bf16.msra.mxu0 0
      %1174 = vmatprep.mubr.bf16.mxu0 0
      %1175 = vmatmul.mubr.bf16.gmra.mrb[0].mxu0 %v1099
      %v1176 = vpop.f32.mrb[0].mxu0
      %v1177 = vadd.f32 0.0, %v1176
      %v1178 = vpop.f32.mrb[0].mxu0
      %v1179 = vpop.f32.mrb[0].mxu0
      %v1180 = vpop.f32.mrb[0].mxu0
      %1181 = vdwg.mxu0
      %1185 = vrot.lane.b32.xlu0 %v1136, 90
      %v1186 = vpop.permute.xlu0 %1185
      %1187 = vrot.lane.b32.xlu0 %v1138, 90
      %v1188 = vpop.permute.xlu0 %1187
      %1189 = vrot.lane.b32.xlu0 %v1177, 90
      %v1190 = vpop.permute.xlu0 %1189
      %vm1191 = vcmask 736256
      %v1192 = vsel %vm1191, %v1186, %v1188
      %v1193 = vsel %vm1191, %v1188, %v1190
      %v1197 = vadd.f32 %v1093, %v1192
      %v1198 = vadd.f32 %v1094, %v1193
      %v1199 = vadd.f32 %v1095, %v1190
      %1200 = vst [vmem:[#allocation2] sm:$0xff] %v1197
      %1201 = vst [vmem:[#allocation2 + $0x8] sm:$0xff] %v1198
      %vm1202 = vcmask 261120
      %1203 = vst.msk [vmem:[#allocation2 + $0x10] sm:$0xff] %vm1202, %v1199
      // Predicated region
      $region41: #{conv2d_module_forward.1} parent=35 // pred_check
        %p1204 = pneg %p248
      $region42: #{conv2d_module_forward.1} parent=35 // pred_check_branch
        %1206 = sbr.rel (%p1204) target = $region44
      $region43: #{conv2d_module_forward.1} parent=35 // pred_region
        %v1207 = vld [vmem:[#allocation2] sm:$0xff]
        %v1208 = vld [vmem:[#allocation2 + $0x8] sm:$0xff]
        %v1209 = vld [vmem:[#allocation2 + $0x10] sm:$0xff]
        %v1210 = vld [vmem:[%s3] sm:$0xff]
        %1212 = vset.pattern.permute.xlu0 0
        %1213 = vperm.xlu0 %1212, %v1210
        %v1214 = vpop.permute.xlu0 %1213
        %v1216 = vadd.f32 %v1207, %v1214
        %v1217 = vadd.f32 %v1208, %v1214
        %v1218 = vadd.f32 %v1209, %v1214
        %s1219 = sld [smem:[#allocation3]]
        %v1220 = vstv %s1219
        %v1221 = vmul.f32 %v1216, %v1220
        %v1222 = vmul.f32 %v1217, %v1220
        %v1223 = vmul.f32 %v1218, %v1220
        %1224 = vst [vmem:[%s246] sm:$0xff] %v1221
        %1225 = vst [vmem:[%s246 + $0x8] sm:$0xff] %v1222
        %1226 = vst.msk [vmem:[%s246 + $0x10] sm:$0xff] %vm1202, %v1223
      $region44: #{conv2d_module_forward.1} parent=35 // pred_fallthru
        _
      %p1227 = scmp.lt.s32.totalorder %s20, 1
      %s1228 = scalar_select %p1227, %s20, 1
      %s1229 = smul.addr %s1228, 3
      %s1230 = smul.addr %s1229, 8
      %s1231 = scalar_lea.vmem %s4, %s1230
      // Predicated region
      $region45: #{conv2d_module_forward.1} parent=35 // pred_check
        %p1232 = pneg %p142
      $region46: #{conv2d_module_forward.1} parent=35 // pred_check_branch
        %1234 = sbr.rel (%p1232) target = $region48
      $region47: #{conv2d_module_forward.1} parent=35 // pred_region
        _
      $region48: #{conv2d_module_forward.1} parent=35 // pred_fallthru
        _
    $region36: #{conv2d_module_forward.1} parent=5 // pred_fallthru
      _
    %p1235 = scmp.le.s32.totalorder 2, %s11
    // Predicated region
    $region49: #{conv2d_module_forward.1} parent=5 // pred_check
      %p1236 = pneg %p1235
    $region50: #{conv2d_module_forward.1} parent=5 // pred_check_branch
      %1238 = sbr.rel (%p1236) target = $region52
    $region51: #{conv2d_module_forward.1} parent=5 // pred_region
      %s1239 = ssub.s32 %s11, 2
      // Predicated region
      $region53: #{conv2d_module_forward.1} parent=51 // pred_check
        %p1240 = pneg %p148
      $region54: #{conv2d_module_forward.1} parent=51 // pred_check_branch
        %1242 = sbr.rel (%p1240) target = $region56
      $region55: #{conv2d_module_forward.1} parent=51 // pred_region
        %p1243 = scmp.lt.s32.totalorder %s22, 1
        %s1244 = scalar_select %p1243, %s22, 1
        %s1245 = smul.addr %s1244, 3
        %s1246 = smul.addr %s1245, 8
        %s1247 = scalar_lea.vmem %s4, %s1246
      $region56: #{conv2d_module_forward.1} parent=51 // pred_fallthru
        _
    $region52: #{conv2d_module_forward.1} parent=5 // pred_fallthru
      _
  $region6: #{conv2d_module_forward.1} parent=0 // loop_footer
    %s15 = sadd.s32 1, %s11
  $region7: #{conv2d_module_forward.1} parent=0 // loop_footer_branch
    %10 = sbr.rel target = $region3
  $region8: #{conv2d_module_forward.1} parent=0 // loop_exit
    _

</llo_original>
